<compile_context>
chip_gen: v5e
topology: v5e:2x2
jax: 0.10.0
libtpu: 0.0.40
codegen_flags: <defaults>
</compile_context>

<pallas_src>
import jax
import jax.numpy as jnp
from jax.experimental import pallas as pl
from jax.experimental.pallas import tpu as pltpu

LN_EPS = 1e-5      # torch.nn.LayerNorm default eps
_LANES = 128

# Explicit, deliberate matmul precision for every dot in the kernel:
#  * Operands stay f32 (no bf16 cast) so the kernel matches PyTorch-f32
#    numerics within the 2e-4 test tolerance (Mosaic's f32 x f32 path at
#    DEFAULT accumulates in f32 at these tiny widths; validated below).
#  * Explicit DEFAULT (rather than inheriting the global default) prevents a
#    silent 3-6x slowdown on this latency-bound chain if
#    jax.default_matmul_precision is flipped to HIGHEST elsewhere.
#  * If a looser tolerance is acceptable, casting the ReLU-linear operands to
#    bf16 is the next latency knob; the LN-stat dots should stay f32 because
#    var = E[x^2] - mean^2 is cancellation-sensitive.
_DOT_PREC = jax.lax.Precision.DEFAULT


# ----------------------------------------------------------------------------
# Fused kernel: entire packed tree, parameters carved from two slabs.
# ----------------------------------------------------------------------------
def _make_fused_kernel(levels_meta, out_cols, total_out):
    def kernel(x_ref, mats_ref, rows_ref, out_ref):
        h = x_ref[...]                                        # (TB, emed_dim) f32
        for lvl in levels_meta:
            for (m_off, m_rows, m_cols), (r_idx, r_cols) in lvl["lins"]:
                w = mats_ref[m_off:m_off + m_rows, :m_cols]   # static slice: free
                b = rows_ref[r_idx:r_idx + 1, :r_cols]
                h = jnp.maximum(
                    jnp.dot(h, w, precision=_DOT_PREC,
                            preferred_element_type=jnp.float32) + b, 0.0)
            a_off, a_rows, a_cols = lvl["avg"]
            avg = mats_ref[a_off:a_off + a_rows, :a_cols]
            # Per-node LayerNorm via block-averaging matmul.  Two independent
            # MXU pushes (mean, E[x^2]); var = E[x^2]-mean^2 breaks the
            # mean->variance serialization.  Biased var + eps inside rsqrt
            # matches torch.nn.LayerNorm.
            m1 = jnp.dot(h, avg, precision=_DOT_PREC,
                         preferred_element_type=jnp.float32)
            m2 = jnp.dot(h * h, avg, precision=_DOT_PREC,
                         preferred_element_type=jnp.float32)
            var = jnp.maximum(m2 - m1 * m1, 0.0)
            h = (h - m1) * jax.lax.rsqrt(var + LN_EPS)
            if lvl["affine"] is not None:                     # leaf level only
                g_idx, b_idx, g_cols = lvl["affine"]
                h = (h * rows_ref[g_idx:g_idx + 1, :g_cols]
                     + rows_ref[b_idx:b_idx + 1, :g_cols])
        pad = out_cols - total_out
        if pad:                                               # lane-dense store
            h = jnp.concatenate(
                [h, jnp.zeros((h.shape[0], pad), jnp.float32)], axis=1)
        out_ref[...] = h.astype(out_ref.dtype)

    return kernel


# ----------------------------------------------------------------------------
# Parameter construction mirroring patch_pipe / patch_pipe_root __init__
# ----------------------------------------------------------------------------
def _init_linear(key, d_in, d_out):
    kw, kb = jax.random.split(key)
    bound = 1.0 / (d_in ** 0.5)                # PyTorch nn.Linear default range
    w = jax.random.uniform(kw, (d_in, d_out), jnp.float32, -bound, bound)
    b = jax.random.uniform(kb, (1, d_out), jnp.float32, -bound, bound)
    return w, b


def build_patch_pipe(key, sizes, sizes_pr_level, forks):
    my_sizes = sizes if len(forks) < 1 else sizes[:sizes_pr_level]
    weights, biases = [], []
    for i in range(len(my_sizes) - 1):
        key, sub = jax.random.split(key)
        w, b = _init_linear(sub, my_sizes[i], my_sizes[i + 1])
        weights.append(w)
        biases.append(b)
    gamma = jnp.ones((1, my_sizes[-1]), jnp.float32)
    beta = jnp.zeros((1, my_sizes[-1]), jnp.float32)
    children = []
    if len(forks) > 0:
        for _ in range(forks[0]):
            key, sub = jax.random.split(key)
            children.append(build_patch_pipe(sub, sizes[sizes_pr_level - 1:],
                                             sizes_pr_level, forks[1:]))
    return dict(weights=weights, biases=biases, gamma=gamma, beta=beta,
                children=children)


def build_patch_pipe_root(key, emed_dim, forks, depth, out_dim):
    sizes_pr_level = depth // len(forks)
    size_step = -int((emed_dim - out_dim) / depth)
    sizes = [i for i in range(emed_dim, out_dim, size_step)]
    sizes = sizes[0:depth] + [out_dim]
    children = []
    for _ in range(forks[0]):
        key, sub = jax.random.split(key)
        children.append(build_patch_pipe(sub, sizes, sizes_pr_level, forks[1:]))
    return children


# ----------------------------------------------------------------------------
# Pack the tree level-by-level into block(-diagonal) matrices.
# ----------------------------------------------------------------------------
def _block_diag(mats):
    rows = sum(m.shape[0] for m in mats)
    cols = sum(m.shape[1] for m in mats)
    out = jnp.zeros((rows, cols), jnp.float32)
    r = c = 0
    for m in mats:
        out = out.at[r:r + m.shape[0], c:c + m.shape[1]].set(m)
        r += m.shape[0]
        c += m.shape[1]
    return out


def _flatten_levels(root_children):
    levels, cur = [], list(root_children)
    while cur:
        levels.append(cur)
        nxt = []
        for node in cur:
            nxt.extend(node["children"])
        cur = nxt
    return levels


def pack_tree(root_children):
    """All nodes at a level share layer shapes (by construction); pack them."""
    levels = _flatten_levels(root_children)
    packed = []
    n_parents = 1
    for nodes in levels:
        n = len(nodes)
        fanout = n // n_parents
        n_lin = len(nodes[0]["weights"])
        lins = []
        for li in range(n_lin):
            if li == 0:
                # Node j reads its parent's (j // fanout) output chunk.
                per_parent = [
                    jnp.concatenate(
                        [nodes[j]["weights"][0]
                         for j in range(p * fanout, (p + 1) * fanout)], axis=1)
                    for p in range(n_parents)]
                w = _block_diag(per_parent)
            else:
                w = _block_diag([nd["weights"][li] for nd in nodes])
            b = jnp.concatenate([nd["biases"][li] for nd in nodes], axis=1)
            lins.append([w, b])
        chunk = nodes[0]["gamma"].shape[-1]
        avg = _block_diag([jnp.full((chunk, chunk), 1.0 / chunk, jnp.float32)] * n)
        gamma = jnp.concatenate([nd["gamma"] for nd in nodes], axis=1)
        beta = jnp.concatenate([nd["beta"] for nd in nodes], axis=1)
        packed.append(dict(lins=lins, avg=avg, gamma=gamma, beta=beta,
                           n_nodes=n, chunk=chunk))
        n_parents = n
    return packed


def _fold_nonleaf_affine(packed):
    """Exact offline fold:  (x*g + b) @ W + c  ==  x @ (diag(g)W) + (b@W + c)."""
    for l in range(len(packed) - 1):
        gamma = packed[l]["gamma"]                     # (1, d)
        beta = packed[l]["beta"]                       # (1, d)
        w0, b0 = packed[l + 1]["lins"][0]
        packed[l + 1]["lins"][0] = [w0 * gamma[0][:, None], b0 + beta @ w0]
        packed[l]["gamma"] = None
        packed[l]["beta"] = None
    return packed


# ----------------------------------------------------------------------------
# Slab assembly + fused forward wrapper
# ----------------------------------------------------------------------------
def make_fused_forward(root_children):
    packed = _fold_nonleaf_affine(pack_tree(root_children))

    max_cols = max(max(w.shape[1] for lvl in packed for w, _ in lvl["lins"]),
                   max(lvl["avg"].shape[1] for lvl in packed))
    slab_cols = _LANES * pl.cdiv(max_cols, _LANES)

    mat_list, row_list = [], []
    mat_off = 0

    def add_mat(m):
        nonlocal mat_off
        off = mat_off
        mat_list.append((off, m))
        mat_off = off + 8 * pl.cdiv(m.shape[0], 8)     # 8-sublane aligned blocks
        return (off, m.shape[0], m.shape[1])

    def add_row(v):
        idx = len(row_list)
        row_list.append(v)
        return (idx, v.shape[1])

    levels_meta = []
    for lvl in packed:
        lin_meta = [(add_mat(w), add_row(b)) for w, b in lvl["lins"]]
        avg_meta = add_mat(lvl["avg"])
        if lvl["gamma"] is None:
            affine_meta = None
        else:
            g_idx, g_cols = add_row(lvl["gamma"])
            b_idx, _ = add_row(lvl["beta"])
            affine_meta = (g_idx, b_idx, g_cols)
        levels_meta.append(dict(lins=lin_meta, avg=avg_meta, affine=affine_meta))

    mats_slab = jnp.zeros((max(8, mat_off), slab_cols), jnp.float32)
    for off, m in mat_list:
        mats_slab = mats_slab.at[off:off + m.shape[0], :m.shape[1]].set(m)
    rows_slab = jnp.zeros((8 * pl.cdiv(max(1, len(row_list)), 8), slab_cols),
                          jnp.float32)
    for idx, v in enumerate(row_list):
        rows_slab = rows_slab.at[idx:idx + 1, :v.shape[1]].set(v)

    n_leaves = packed[-1]["n_nodes"]
    leaf_dim = packed[-1]["chunk"]
    total_out = n_leaves * leaf_dim
    out_cols = _LANES * pl.cdiv(total_out, _LANES)     # lane-dense output slab
    emed_dim = packed[0]["lins"][0][0].shape[0]

    kernel = _make_fused_kernel(levels_meta, out_cols, total_out)

    # Advisory cost estimate (per-row flops * batch) for XLA's scheduler.
    flops_per_row = 0
    for lvl in levels_meta:
        for (_, m_rows, m_cols), _ in lvl["lins"]:
            flops_per_row += 2 * m_rows * m_cols
        _, a_rows, a_cols = lvl["avg"]
        flops_per_row += 2 * 2 * a_rows * a_cols
    n_levels = len(levels_meta)

    def forward(x, mats, rows):
        batch = x.shape[0]
        tb = batch if batch <= 512 else 512            # row tile (multiple of 8
        grid = (pl.cdiv(batch, tb),)                   #  or == full batch)
        cost = pl.CostEstimate(
            flops=flops_per_row * batch,
            transcendentals=batch * n_levels,
            bytes_accessed=4 * (x.size + mats.size + rows.size + batch * out_cols))
        slab = pl.pallas_call(
            kernel,
            out_shape=jax.ShapeDtypeStruct((batch, out_cols), jnp.float32),
            grid=grid,
            in_specs=[
                pl.BlockSpec((tb, emed_dim), lambda i: (i, 0)),
                pl.BlockSpec(mats.shape, lambda i: (0, 0)),    # resident params
                pl.BlockSpec(rows.shape, lambda i: (0, 0)),    # resident params
            ],
            out_specs=pl.BlockSpec((tb, out_cols), lambda i: (i, 0)),
            compiler_params=pltpu.CompilerParams(
                dimension_semantics=("parallel",)),            # 2 TCs on v7x
            cost_estimate=cost,
        )(x, mats, rows)
        # DFS leaf order == left-to-right order of the packed last level.
        return [slab[:, j * leaf_dim:(j + 1) * leaf_dim] for j in range(n_leaves)]

    return jax.jit(forward), mats_slab, rows_slab


# ----------------------------------------------------------------------------
# Pure-JAX reference of the original (unfused) tree for correctness checking.
# ----------------------------------------------------------------------------
def _mlp_ln_ref(x, weights, biases, gamma, beta):
    h = x.astype(jnp.float32)
    for w, b in zip(weights, biases):
        h = jnp.maximum(h @ w + b, 0.0)
    mean = jnp.mean(h, -1, keepdims=True)
    var = jnp.mean((h - mean) ** 2, -1, keepdims=True)
    return (h - mean) / jnp.sqrt(var + LN_EPS) * gamma + beta


def _patch_pipe_ref(params, x):
    x = _mlp_ln_ref(x, params["weights"], params["biases"],
                    params["gamma"], params["beta"])
    out = []
    for child in params["children"]:
        out = out + _patch_pipe_ref(child, x)
    if len(out) == 0:
        return [x]
    return out


def patch_pipe_root_ref(root_children, x):
    out = []
    for child in root_children:
        out = out + _patch_pipe_ref(child, x)
    return out


# ----------------------------------------------------------------------------
if __name__ == "__main__":
    # emed_dim=32, out_dim=8, depth=4, forks=[2, 2] -> 4 leaf outputs (batch, 8)
    emed_dim, out_dim, depth, forks = 32, 8, 4, [2, 2]
    batch = 8

    key = jax.random.PRNGKey(0)
    key, kx, kp = jax.random.split(key, 3)
    x = jax.random.normal(kx, (batch, emed_dim), jnp.float32)

    root_children = build_patch_pipe_root(kp, emed_dim, forks, depth, out_dim)

    fused_forward, mats_slab, rows_slab = make_fused_forward(root_children)

    outs = fused_forward(x, mats_slab, rows_slab)
    outs = [jax.block_until_ready(o) for o in outs]

    # Verify against a pure-JAX reference of the same (unfused, un-folded) tree.
    refs = patch_pipe_root_ref(root_children, x)
    assert len(outs) == len(refs) == 4
    for o, r in zip(outs, refs):
        assert o.shape == (batch, out_dim)
        assert jnp.allclose(o, r, atol=2e-4, rtol=2e-4), \
            float(jnp.max(jnp.abs(o - r)))

    print("KERNEL_OK")
</pallas_src>

<mosaic_0001>
module attributes {stable_mosaic.version = 11 : i64} {
  func.func @kernel(%arg0: i32, %arg1: memref<8x32xf32, #tpu.memory_space<vmem>>, %arg2: memref<312x128xf32, #tpu.memory_space<vmem>>, %arg3: memref<8x128xf32, #tpu.memory_space<vmem>>, %arg4: memref<8x128xf32, #tpu.memory_space<vmem>>) attributes {dimension_semantics = [#tpu.dimension_semantics<parallel>], iteration_bounds = array<i64: 1>, scalar_prefetch = 0 : i64, scratch_operands = 0 : i64, tpu.core_type = #tpu.core_type<tc>, window_params = [{transform_indices = @transform_0, window_bounds = array<i64: 8, 32>}, {pipeline_mode = #tpu.pipeline_mode<synchronous>, transform_indices = @transform_1, window_bounds = array<i64: 312, 128>}, {pipeline_mode = #tpu.pipeline_mode<synchronous>, transform_indices = @transform_2, window_bounds = array<i64: 8, 128>}, {transform_indices = @transform_3, window_bounds = array<i64: 8, 128>}]} {
    %c0 = arith.constant 0 : index
    %c0_0 = arith.constant 0 : index
    %0 = vector.load %arg1[%c0, %c0_0] : memref<8x32xf32, #tpu.memory_space<vmem>>, vector<8x32xf32>
    %c0_1 = arith.constant 0 : index
    %c0_2 = arith.constant 0 : index
    %1 = vector.load %arg2[%c0_1, %c0_2] : memref<312x128xf32, #tpu.memory_space<vmem>>, vector<32x52xf32>
    %c0_3 = arith.constant 0 : index
    %c0_4 = arith.constant 0 : index
    %2 = vector.load %arg3[%c0_3, %c0_4] : memref<8x128xf32, #tpu.memory_space<vmem>>, vector<1x52xf32>
    %cst = arith.constant dense<0.000000e+00> : vector<8x52xf32>
    %3 = tpu.matmul %0, %1, %cst {dimension_numbers = #tpu.dot_dimension_numbers<[1], [0], [0], [1], [0, 0, 1, 1], [], []>} : vector<8x32xf32>, vector<32x52xf32>, vector<8x52xf32> -> vector<8x52xf32>
    %4 = vector.broadcast %2 : vector<1x52xf32> to vector<8x52xf32>
    %5 = arith.addf %3, %4 : vector<8x52xf32>
    %cst_5 = arith.constant 0.000000e+00 : f32
    %6 = vector.broadcast %cst_5 : f32 to vector<8x52xf32>
    %7 = arith.maximumf %5, %6 : vector<8x52xf32>
    %c32 = arith.constant 32 : index
    %c0_6 = arith.constant 0 : index
    %8 = vector.load %arg2[%c32, %c0_6] : memref<312x128xf32, #tpu.memory_space<vmem>>, vector<52x52xf32>
    %cst_7 = arith.constant dense<0.000000e+00> : vector<8x52xf32>
    %9 = tpu.matmul %7, %8, %cst_7 {dimension_numbers = #tpu.dot_dimension_numbers<[1], [0], [0], [1], [0, 0, 1, 1], [], []>} : vector<8x52xf32>, vector<52x52xf32>, vector<8x52xf32> -> vector<8x52xf32>
    %10 = arith.mulf %7, %7 : vector<8x52xf32>
    %cst_8 = arith.constant dense<0.000000e+00> : vector<8x52xf32>
    %11 = tpu.matmul %10, %8, %cst_8 {dimension_numbers = #tpu.dot_dimension_numbers<[1], [0], [0], [1], [0, 0, 1, 1], [], []>} : vector<8x52xf32>, vector<52x52xf32>, vector<8x52xf32> -> vector<8x52xf32>
    %12 = arith.mulf %9, %9 : vector<8x52xf32>
    %13 = arith.subf %11, %12 : vector<8x52xf32>
    %cst_9 = arith.constant 0.000000e+00 : f32
    %14 = vector.broadcast %cst_9 : f32 to vector<8x52xf32>
    %15 = arith.maximumf %13, %14 : vector<8x52xf32>
    %16 = arith.subf %7, %9 : vector<8x52xf32>
    %cst_10 = arith.constant 9.99999974E-6 : f32
    %17 = vector.broadcast %cst_10 : f32 to vector<8x52xf32>
    %18 = arith.addf %15, %17 : vector<8x52xf32>
    %19 = math.rsqrt %18 : vector<8x52xf32>
    %20 = arith.mulf %16, %19 : vector<8x52xf32>
    %c88 = arith.constant 88 : index
    %c0_11 = arith.constant 0 : index
    %21 = vector.load %arg2[%c88, %c0_11] : memref<312x128xf32, #tpu.memory_space<vmem>>, vector<52x80xf32>
    %c1 = arith.constant 1 : index
    %c0_12 = arith.constant 0 : index
    %22 = vector.load %arg3[%c1, %c0_12] : memref<8x128xf32, #tpu.memory_space<vmem>>, vector<1x80xf32>
    %cst_13 = arith.constant dense<0.000000e+00> : vector<8x80xf32>
    %23 = tpu.matmul %20, %21, %cst_13 {dimension_numbers = #tpu.dot_dimension_numbers<[1], [0], [0], [1], [0, 0, 1, 1], [], []>} : vector<8x52xf32>, vector<52x80xf32>, vector<8x80xf32> -> vector<8x80xf32>
    %24 = vector.broadcast %22 : vector<1x80xf32> to vector<8x80xf32>
    %25 = arith.addf %23, %24 : vector<8x80xf32>
    %cst_14 = arith.constant 0.000000e+00 : f32
    %26 = vector.broadcast %cst_14 : f32 to vector<8x80xf32>
    %27 = arith.maximumf %25, %26 : vector<8x80xf32>
    %c144 = arith.constant 144 : index
    %c0_15 = arith.constant 0 : index
    %28 = vector.load %arg2[%c144, %c0_15] : memref<312x128xf32, #tpu.memory_space<vmem>>, vector<80x56xf32>
    %c2 = arith.constant 2 : index
    %c0_16 = arith.constant 0 : index
    %29 = vector.load %arg3[%c2, %c0_16] : memref<8x128xf32, #tpu.memory_space<vmem>>, vector<1x56xf32>
    %cst_17 = arith.constant dense<0.000000e+00> : vector<8x56xf32>
    %30 = tpu.matmul %27, %28, %cst_17 {dimension_numbers = #tpu.dot_dimension_numbers<[1], [0], [0], [1], [0, 0, 1, 1], [], []>} : vector<8x80xf32>, vector<80x56xf32>, vector<8x56xf32> -> vector<8x56xf32>
    %31 = vector.broadcast %29 : vector<1x56xf32> to vector<8x56xf32>
    %32 = arith.addf %30, %31 : vector<8x56xf32>
    %cst_18 = arith.constant 0.000000e+00 : f32
    %33 = vector.broadcast %cst_18 : f32 to vector<8x56xf32>
    %34 = arith.maximumf %32, %33 : vector<8x56xf32>
    %c224 = arith.constant 224 : index
    %c0_19 = arith.constant 0 : index
    %35 = vector.load %arg2[%c224, %c0_19] : memref<312x128xf32, #tpu.memory_space<vmem>>, vector<56x32xf32>
    %c3 = arith.constant 3 : index
    %c0_20 = arith.constant 0 : index
    %36 = vector.load %arg3[%c3, %c0_20] : memref<8x128xf32, #tpu.memory_space<vmem>>, vector<1x32xf32>
    %cst_21 = arith.constant dense<0.000000e+00> : vector<8x32xf32>
    %37 = tpu.matmul %34, %35, %cst_21 {dimension_numbers = #tpu.dot_dimension_numbers<[1], [0], [0], [1], [0, 0, 1, 1], [], []>} : vector<8x56xf32>, vector<56x32xf32>, vector<8x32xf32> -> vector<8x32xf32>
    %38 = vector.broadcast %36 : vector<1x32xf32> to vector<8x32xf32>
    %39 = arith.addf %37, %38 : vector<8x32xf32>
    %cst_22 = arith.constant 0.000000e+00 : f32
    %40 = vector.broadcast %cst_22 : f32 to vector<8x32xf32>
    %41 = arith.maximumf %39, %40 : vector<8x32xf32>
    %c280 = arith.constant 280 : index
    %c0_23 = arith.constant 0 : index
    %42 = vector.load %arg2[%c280, %c0_23] : memref<312x128xf32, #tpu.memory_space<vmem>>, vector<32x32xf32>
    %cst_24 = arith.constant dense<0.000000e+00> : vector<8x32xf32>
    %43 = tpu.matmul %41, %42, %cst_24 {dimension_numbers = #tpu.dot_dimension_numbers<[1], [0], [0], [1], [0, 0, 1, 1], [], []>} : vector<8x32xf32>, vector<32x32xf32>, vector<8x32xf32> -> vector<8x32xf32>
    %44 = arith.mulf %41, %41 : vector<8x32xf32>
    %cst_25 = arith.constant dense<0.000000e+00> : vector<8x32xf32>
    %45 = tpu.matmul %44, %42, %cst_25 {dimension_numbers = #tpu.dot_dimension_numbers<[1], [0], [0], [1], [0, 0, 1, 1], [], []>} : vector<8x32xf32>, vector<32x32xf32>, vector<8x32xf32> -> vector<8x32xf32>
    %46 = arith.mulf %43, %43 : vector<8x32xf32>
    %47 = arith.subf %45, %46 : vector<8x32xf32>
    %cst_26 = arith.constant 0.000000e+00 : f32
    %48 = vector.broadcast %cst_26 : f32 to vector<8x32xf32>
    %49 = arith.maximumf %47, %48 : vector<8x32xf32>
    %50 = arith.subf %41, %43 : vector<8x32xf32>
    %cst_27 = arith.constant 9.99999974E-6 : f32
    %51 = vector.broadcast %cst_27 : f32 to vector<8x32xf32>
    %52 = arith.addf %49, %51 : vector<8x32xf32>
    %53 = math.rsqrt %52 : vector<8x32xf32>
    %54 = arith.mulf %50, %53 : vector<8x32xf32>
    %c4 = arith.constant 4 : index
    %c0_28 = arith.constant 0 : index
    %55 = vector.load %arg3[%c4, %c0_28] : memref<8x128xf32, #tpu.memory_space<vmem>>, vector<1x32xf32>
    %56 = vector.broadcast %55 : vector<1x32xf32> to vector<8x32xf32>
    %57 = arith.mulf %54, %56 : vector<8x32xf32>
    %c5 = arith.constant 5 : index
    %c0_29 = arith.constant 0 : index
    %58 = vector.load %arg3[%c5, %c0_29] : memref<8x128xf32, #tpu.memory_space<vmem>>, vector<1x32xf32>
    %59 = vector.broadcast %58 : vector<1x32xf32> to vector<8x32xf32>
    %60 = arith.addf %57, %59 : vector<8x32xf32>
    %cst_30 = arith.constant 0.000000e+00 : f32
    %61 = vector.broadcast %cst_30 : f32 to vector<8x96xf32>
    %62 = tpu.concatenate %60, %61 in 1 : vector<8x32xf32>, vector<8x96xf32> -> vector<8x128xf32>
    %c0_31 = arith.constant 0 : index
    %c0_32 = arith.constant 0 : index
    %63 = vector.load %arg4[%c0_31, %c0_32] : memref<8x128xf32, #tpu.memory_space<vmem>>, vector<8x128xf32>
    tpu.vector_store %arg4[%c0_31, %c0_32], %62 {strides = array<i32>} : memref<8x128xf32, #tpu.memory_space<vmem>>, vector<8x128xf32>,
    return
  }
  func.func @transform_0(%arg0: i32) -> (i32, i32) {
    %c0_i32 = arith.constant 0 : i32
    %c0_i32_0 = arith.constant 0 : i32
    return %arg0, %c0_i32 : i32, i32
  }
  func.func @transform_1(%arg0: i32) -> (i32, i32) {
    %c0_i32 = arith.constant 0 : i32
    %c0_i32_0 = arith.constant 0 : i32
    %c0_i32_1 = arith.constant 0 : i32
    return %c0_i32, %c0_i32_0 : i32, i32
  }
  func.func @transform_2(%arg0: i32) -> (i32, i32) {
    %c0_i32 = arith.constant 0 : i32
    %c0_i32_0 = arith.constant 0 : i32
    %c0_i32_1 = arith.constant 0 : i32
    return %c0_i32, %c0_i32_0 : i32, i32
  }
  func.func @transform_3(%arg0: i32) -> (i32, i32) {
    %c0_i32 = arith.constant 0 : i32
    %c0_i32_0 = arith.constant 0 : i32
    return %arg0, %c0_i32 : i32, i32
  }
}

</mosaic_0001>

<llo_original>
// kernel: forward.1
$region0: #{forward.1}
  #allocation0 [shape = 'u32[]', space=smem, size = 0x4, offset = 0x4, fixed_abs, tag = 'smem constant byte address 0x4 - core index']
  #allocation1 [shape = 'u32[72,128]{1,0:T(1,128)}', space=vmem, size = 0x9000, scoped, tag = 'internal scratch']
  %s0 = inlined_call_operand.hbm [shape: f32[8,32], index: 0, kind: input, shape index: {}]
  %s1 = inlined_call_operand.hbm [shape: f32[312,128], index: 1, kind: input, shape index: {}]
  %s2 = inlined_call_operand.hbm [shape: f32[8,128], index: 2, kind: input, shape index: {}]
  %s3 = inlined_call_operand.vmem [shape: f32[8,128], index: 3, kind: output, shape index: {}]
  %s4 = sld [smem:[#allocation0]]
  $region34: #{forward.1} parent=0
    _
  %s6 = ssub.s32 1, %s4
  %s7 = scalar_select 0, %s6, %s4
  $region1: #{forward.1} parent=0
    #allocation2 [shape = 'u8[4096]{0}', space=vmem, size = 0x1000, scoped, tag = 'input window, operand 0, single buffered']
    #allocation3 [shape = 's32[1]{0}', space=sflag, size = 0x4, scoped, tag = 'scoped memory for forward.1']
    #allocation4 [shape = 'u8[159744]{0}', space=vmem, size = 0x27000, scoped, tag = 'input window, operand 1, single buffered']
    #allocation5 [shape = 's32[1]{0}', space=sflag, size = 0x4, scoped, tag = 'scoped memory for forward.1']
    #allocation6 [shape = 'u8[4096]{0}', space=vmem, size = 0x1000, scoped, tag = 'input window, operand 2, single buffered']
    %8 = vsyncpa [#allocation3], 0
    %9 = vsyncpa [#allocation5], 0
    // Predicated region
    $region2: #{forward.1} parent=1 // pred_check
      _
    $region3: #{forward.1} parent=1 // pred_check_branch
      %11 = sbr.rel (0) target = $region5
    $region4: #{forward.1} parent=1 // pred_region
      %13 = vsyncadd [#allocation3], 0
      %s15 = sshll.u32 %s0, 4
      %s16 = int_to_ptr.hbm [resolvable:$true] %s15
      %s17 = sshll.u32 [#allocation2], 4
      %s18 = int_to_ptr.vmem [resolvable:$true] %s17
      %20 = dma.hbm_to_vmem [thread:$0]  %s16, 128, %s18, [#allocation3]
    $region5: #{forward.1} parent=1 // pred_fallthru
      _
    // Predicated region
    $region6: #{forward.1} parent=1 // pred_check
      _
    $region7: #{forward.1} parent=1 // pred_check_branch
      %22 = sbr.rel (0) target = $region9
    $region8: #{forward.1} parent=1 // pred_region
      %24 = vsyncadd [#allocation5], 0
      %s25 = sshll.u32 %s1, 4
      %s26 = int_to_ptr.hbm [resolvable:$true] %s25
      %s27 = sshll.u32 [#allocation4], 4
      %s28 = int_to_ptr.vmem [resolvable:$true] %s27
      %33 = dma.hbm_to_vmem [thread:$0]  %s26, 4992, %s28, [#allocation5], 128, 128, 8
    $region9: #{forward.1} parent=1 // pred_fallthru
      _
    // Predicated region
    $region10: #{forward.1} parent=1 // pred_check
      _
    $region11: #{forward.1} parent=1 // pred_check_branch
      %35 = sbr.rel (0) target = $region13
    $region12: #{forward.1} parent=1 // pred_region
      %37 = vsyncadd [#allocation5], 0
      %s39 = sshll.u32 %s2, 4
      %s40 = int_to_ptr.hbm [resolvable:$true] %s39
      %s41 = sshll.u32 [#allocation6], 4
      %s42 = int_to_ptr.vmem [resolvable:$true] %s41
      %44 = dma.hbm_to_vmem [thread:$0]  %s40, 128, %s42, [#allocation5]
    $region13: #{forward.1} parent=1 // pred_fallthru
      _
    // Predicated region
    $region14: #{forward.1} parent=1 // pred_check
      _
    $region15: #{forward.1} parent=1 // pred_check_branch
      %46 = sbr.rel (0) target = $region17
    $region16: #{forward.1} parent=1 // pred_region
      %48 = dma.done [#allocation3], 128
    $region17: #{forward.1} parent=1 // pred_fallthru
      _
    // Predicated region
    $region18: #{forward.1} parent=1 // pred_check
      _
    $region19: #{forward.1} parent=1 // pred_check_branch
      %50 = sbr.rel (0) target = $region21
    $region20: #{forward.1} parent=1 // pred_region
      %52 = dma.done [#allocation5], 4992
    $region21: #{forward.1} parent=1 // pred_fallthru
      _
    // Predicated region
    $region22: #{forward.1} parent=1 // pred_check
      _
    $region23: #{forward.1} parent=1 // pred_check_branch
      %54 = sbr.rel (0) target = $region25
    $region24: #{forward.1} parent=1 // pred_region
      %56 = dma.done [#allocation5], 128
    $region25: #{forward.1} parent=1 // pred_fallthru
      _
    %v57 = vld [vmem:[#allocation2] sm:$0xff]
    %v58 = vld [vmem:[#allocation4] sm:$0xff]
    %v59 = vld [vmem:[#allocation4 + $0x8] sm:$0xff]
    %v60 = vld [vmem:[#allocation4 + $0x10] sm:$0xff]
    %v61 = vld [vmem:[#allocation4 + $0x18] sm:$0xff]
    %v62 = vld [vmem:[#allocation6] sm:$0x1]
    %v63 = vperm.slane %v62, 0
    %vm64 = vcmask 261120
    %v66 = vsel %vm64, %v57, 0
    %68 = vmatpush.msra.mxu0 0.0
    %69 = vmatpush.msra.mxu0 0.0
    %70 = vmatpush.msra.mxu0 0.0
    %71 = vmatpush.msra.mxu0 0.0
    %72 = vmatpush.msra.mxu0 0.0
    %73 = vmatpush.msra.mxu0 0.0
    %74 = vmatpush.msra.mxu0 0.0
    %75 = vmatpush.msra.mxu0 0.0
    %76 = vmatpush.msra.mxu0 0.0
    %77 = vmatpush.msra.mxu0 0.0
    %78 = vmatpush.msra.mxu0 0.0
    %79 = vmatpush.msra.mxu0 0.0
    %80 = vmatpush.msra.mxu0 %v61
    %81 = vmatpush.msra.mxu0 %v60
    %82 = vmatpush.msra.mxu0 %v59
    %83 = vmatpush.msra.mxu0 %v58
    %84 = vmatmul.f32.gmra.mxu0 %v66
    %v85 = vpop.f32.mrf.mxu0
    %v86 = vadd.f32 %v63, %v85
    %87 = vdwg.mxu0
    %v88 = vmax.f32 %v86, 0.0
    %v89 = vld [vmem:[#allocation4 + $0x20] sm:$0xff]
    %v90 = vld [vmem:[#allocation4 + $0x28] sm:$0xff]
    %v91 = vld [vmem:[#allocation4 + $0x30] sm:$0xff]
    %v92 = vld [vmem:[#allocation4 + $0x38] sm:$0xff]
    %v93 = vld [vmem:[#allocation4 + $0x40] sm:$0xff]
    %v94 = vld [vmem:[#allocation4 + $0x48] sm:$0xff]
    %v95 = vld [vmem:[#allocation4 + $0x50] sm:$0xf]
    %vm96 = vcmask 424960
    %v98 = vsel %vm96, %v88, 0
    %vm100 = vcmask 1043456
    %v102 = vsel %vm100, %v95, 0
    %104 = vmatpush.msra.mxu0 0.0
    %105 = vmatpush.msra.mxu0 0.0
    %106 = vmatpush.msra.mxu0 0.0
    %107 = vmatpush.msra.mxu0 0.0
    %108 = vmatpush.msra.mxu0 0.0
    %109 = vmatpush.msra.mxu0 0.0
    %110 = vmatpush.msra.mxu0 0.0
    %111 = vmatpush.msra.mxu0 0.0
    %112 = vmatpush.msra.mxu0 0.0
    %113 = vmatpush.msra.mxu0 %v102
    %114 = vmatpush.msra.mxu0 %v94
    %115 = vmatpush.msra.mxu0 %v93
    %116 = vmatpush.msra.mxu0 %v92
    %117 = vmatpush.msra.mxu0 %v91
    %118 = vmatpush.msra.mxu0 %v90
    %119 = vmatpush.msra.mxu0 %v89
    %120 = vmatmul.f32.gmra.mxu0 %v98
    %v121 = vpop.f32.mrf.mxu0
    %v122 = vadd.f32 0.0, %v121
    %123 = vdwg.mxu0
    %v124 = vmul.f32 %v88, %v88
    %v126 = vsel %vm96, %v124, 0
    %128 = vmatpush.msra.mxu0 0.0
    %129 = vmatpush.msra.mxu0 0.0
    %130 = vmatpush.msra.mxu0 0.0
    %131 = vmatpush.msra.mxu0 0.0
    %132 = vmatpush.msra.mxu0 0.0
    %133 = vmatpush.msra.mxu0 0.0
    %134 = vmatpush.msra.mxu0 0.0
    %135 = vmatpush.msra.mxu0 0.0
    %136 = vmatpush.msra.mxu0 0.0
    %137 = vmatpush.msra.mxu0 %v102
    %138 = vmatpush.msra.mxu0 %v94
    %139 = vmatpush.msra.mxu0 %v93
    %140 = vmatpush.msra.mxu0 %v92
    %141 = vmatpush.msra.mxu0 %v91
    %142 = vmatpush.msra.mxu0 %v90
    %143 = vmatpush.msra.mxu0 %v89
    %144 = vmatmul.f32.gmra.mxu0 %v126
    %v145 = vpop.f32.mrf.mxu0
    %v146 = vadd.f32 0.0, %v145
    %147 = vdwg.mxu0
    %v148 = vmul.f32 %v122, %v122
    %v149 = vsub.f32 %v146, %v148
    %v150 = vmax.f32 %v149, 0.0
    %v151 = vsub.f32 %v88, %v122
    %v152 = vadd.f32 %v150, 1e-05
    %v153 = vrsqrt.pop %v152
    %v154 = vmul.f32 %v153, %v152
    %v155 = vmul.f32 %v154, %v153
    %v156 = vmul.f32 0.5, %v155
    %v157 = vsub.f32 1.5, %v156
    %v158 = vmul.f32 %v153, %v157
    %vm159 = vweird.f32 %v152
    %vm160 = vweird.f32 %v153
    %vm161 = vmor %vm159, %vm160
    %v162 = vsel %vm161, %v153, %v158
    %v163 = vmul.f32 %v151, %v162
    %v164 = vld [vmem:[#allocation4 + $0x58] sm:$0xff]
    %v165 = vld [vmem:[#allocation4 + $0x60] sm:$0xff]
    %v166 = vld [vmem:[#allocation4 + $0x68] sm:$0xff]
    %v167 = vld [vmem:[#allocation4 + $0x70] sm:$0xff]
    %v168 = vld [vmem:[#allocation4 + $0x78] sm:$0xff]
    %v169 = vld [vmem:[#allocation4 + $0x80] sm:$0xff]
    %v170 = vld [vmem:[#allocation4 + $0x88] sm:$0xf]
    %v171 = vld [vmem:[#allocation6 + $0x1] sm:$0x1]
    %v172 = vperm.slane %v171, 0
    %v174 = vsel %vm96, %v163, 0
    %v177 = vsel %vm100, %v170, 0
    %179 = vmatpush.msra.mxu0 0.0
    %180 = vmatpush.msra.mxu0 0.0
    %181 = vmatpush.msra.mxu0 0.0
    %182 = vmatpush.msra.mxu0 0.0
    %183 = vmatpush.msra.mxu0 0.0
    %184 = vmatpush.msra.mxu0 0.0
    %185 = vmatpush.msra.mxu0 0.0
    %186 = vmatpush.msra.mxu0 0.0
    %187 = vmatpush.msra.mxu0 0.0
    %188 = vmatpush.msra.mxu0 %v177
    %189 = vmatpush.msra.mxu0 %v169
    %190 = vmatpush.msra.mxu0 %v168
    %191 = vmatpush.msra.mxu0 %v167
    %192 = vmatpush.msra.mxu0 %v166
    %193 = vmatpush.msra.mxu0 %v165
    %194 = vmatpush.msra.mxu0 %v164
    %195 = vmatmul.f32.gmra.mxu0 %v174
    %v196 = vpop.f32.mrf.mxu0
    %v197 = vadd.f32 %v172, %v196
    %198 = vdwg.mxu0
    %v199 = vmax.f32 %v197, 0.0
    %v200 = vld [vmem:[#allocation4 + $0x90] sm:$0xff]
    %v201 = vld [vmem:[#allocation4 + $0x98] sm:$0xff]
    %v202 = vld [vmem:[#allocation4 + $0xa0] sm:$0xff]
    %v203 = vld [vmem:[#allocation4 + $0xa8] sm:$0xff]
    %v204 = vld [vmem:[#allocation4 + $0xb0] sm:$0xff]
    %v205 = vld [vmem:[#allocation4 + $0xb8] sm:$0xff]
    %v206 = vld [vmem:[#allocation4 + $0xc0] sm:$0xff]
    %v207 = vld [vmem:[#allocation4 + $0xc8] sm:$0xff]
    %v208 = vld [vmem:[#allocation4 + $0xd0] sm:$0xff]
    %v209 = vld [vmem:[#allocation4 + $0xd8] sm:$0xff]
    %v210 = vld [vmem:[#allocation6 + $0x2] sm:$0x1]
    %v211 = vperm.slane %v210, 0
    %vm212 = vcmask 654336
    %v214 = vsel %vm212, %v199, 0
    %216 = vmatpush.msra.mxu0 0.0
    %217 = vmatpush.msra.mxu0 0.0
    %218 = vmatpush.msra.mxu0 0.0
    %219 = vmatpush.msra.mxu0 0.0
    %220 = vmatpush.msra.mxu0 0.0
    %221 = vmatpush.msra.mxu0 0.0
    %222 = vmatpush.msra.mxu0 %v209
    %223 = vmatpush.msra.mxu0 %v208
    %224 = vmatpush.msra.mxu0 %v207
    %225 = vmatpush.msra.mxu0 %v206
    %226 = vmatpush.msra.mxu0 %v205
    %227 = vmatpush.msra.mxu0 %v204
    %228 = vmatpush.msra.mxu0 %v203
    %229 = vmatpush.msra.mxu0 %v202
    %230 = vmatpush.msra.mxu0 %v201
    %231 = vmatpush.msra.mxu0 %v200
    %232 = vmatmul.f32.gmra.mxu0 %v214
    %v233 = vpop.f32.mrf.mxu0
    %v234 = vadd.f32 %v211, %v233
    %235 = vdwg.mxu0
    %v236 = vmax.f32 %v234, 0.0
    %v237 = vld [vmem:[#allocation4 + $0xe0] sm:$0xff]
    %v238 = vld [vmem:[#allocation4 + $0xe8] sm:$0xff]
    %v239 = vld [vmem:[#allocation4 + $0xf0] sm:$0xff]
    %v240 = vld [vmem:[#allocation4 + $0xf8] sm:$0xff]
    %v241 = vld [vmem:[#allocation4 + $0x100] sm:$0xff]
    %v242 = vld [vmem:[#allocation4 + $0x108] sm:$0xff]
    %v243 = vld [vmem:[#allocation4 + $0x110] sm:$0xff]
    %v244 = vld [vmem:[#allocation6 + $0x3] sm:$0x1]
    %v245 = vperm.slane %v244, 0
    %vm246 = vcmask 457728
    %v248 = vsel %vm246, %v236, 0
    %250 = vmatpush.msra.mxu0 0.0
    %251 = vmatpush.msra.mxu0 0.0
    %252 = vmatpush.msra.mxu0 0.0
    %253 = vmatpush.msra.mxu0 0.0
    %254 = vmatpush.msra.mxu0 0.0
    %255 = vmatpush.msra.mxu0 0.0
    %256 = vmatpush.msra.mxu0 0.0
    %257 = vmatpush.msra.mxu0 0.0
    %258 = vmatpush.msra.mxu0 0.0
    %259 = vmatpush.msra.mxu0 %v243
    %260 = vmatpush.msra.mxu0 %v242
    %261 = vmatpush.msra.mxu0 %v241
    %262 = vmatpush.msra.mxu0 %v240
    %263 = vmatpush.msra.mxu0 %v239
    %264 = vmatpush.msra.mxu0 %v238
    %265 = vmatpush.msra.mxu0 %v237
    %266 = vmatmul.f32.gmra.mxu0 %v248
    %v267 = vpop.f32.mrf.mxu0
    %v268 = vadd.f32 %v245, %v267
    %269 = vdwg.mxu0
    %v270 = vmax.f32 %v268, 0.0
    %v271 = vld [vmem:[#allocation4 + $0x118] sm:$0xff]
    %v272 = vld [vmem:[#allocation4 + $0x120] sm:$0xff]
    %v273 = vld [vmem:[#allocation4 + $0x128] sm:$0xff]
    %v274 = vld [vmem:[#allocation4 + $0x130] sm:$0xff]
    %v276 = vsel %vm64, %v270, 0
    %278 = vmatpush.msra.mxu0 0.0
    %279 = vmatpush.msra.mxu0 0.0
    %280 = vmatpush.msra.mxu0 0.0
    %281 = vmatpush.msra.mxu0 0.0
    %282 = vmatpush.msra.mxu0 0.0
    %283 = vmatpush.msra.mxu0 0.0
    %284 = vmatpush.msra.mxu0 0.0
    %285 = vmatpush.msra.mxu0 0.0
    %286 = vmatpush.msra.mxu0 0.0
    %287 = vmatpush.msra.mxu0 0.0
    %288 = vmatpush.msra.mxu0 0.0
    %289 = vmatpush.msra.mxu0 0.0
    %290 = vmatpush.msra.mxu0 %v274
    %291 = vmatpush.msra.mxu0 %v273
    %292 = vmatpush.msra.mxu0 %v272
    %293 = vmatpush.msra.mxu0 %v271
    %294 = vmatmul.f32.gmra.mxu0 %v276
    %v295 = vpop.f32.mrf.mxu0
    %v296 = vadd.f32 0.0, %v295
    %297 = vdwg.mxu0
    %v298 = vmul.f32 %v270, %v270
    %v300 = vsel %vm64, %v298, 0
    %302 = vmatpush.msra.mxu0 0.0
    %303 = vmatpush.msra.mxu0 0.0
    %304 = vmatpush.msra.mxu0 0.0
    %305 = vmatpush.msra.mxu0 0.0
    %306 = vmatpush.msra.mxu0 0.0
    %307 = vmatpush.msra.mxu0 0.0
    %308 = vmatpush.msra.mxu0 0.0
    %309 = vmatpush.msra.mxu0 0.0
    %310 = vmatpush.msra.mxu0 0.0
    %311 = vmatpush.msra.mxu0 0.0
    %312 = vmatpush.msra.mxu0 0.0
    %313 = vmatpush.msra.mxu0 0.0
    %314 = vmatpush.msra.mxu0 %v274
    %315 = vmatpush.msra.mxu0 %v273
    %316 = vmatpush.msra.mxu0 %v272
    %317 = vmatpush.msra.mxu0 %v271
    %318 = vmatmul.f32.gmra.mxu0 %v300
    %v319 = vpop.f32.mrf.mxu0
    %v320 = vadd.f32 0.0, %v319
    %321 = vdwg.mxu0
    %v322 = vmul.f32 %v296, %v296
    %v323 = vsub.f32 %v320, %v322
    %v324 = vmax.f32 %v323, 0.0
    %v325 = vsub.f32 %v270, %v296
    %v326 = vadd.f32 %v324, 1e-05
    %v327 = vrsqrt.pop %v326
    %v328 = vmul.f32 %v327, %v326
    %v329 = vmul.f32 %v328, %v327
    %v330 = vmul.f32 0.5, %v329
    %v331 = vsub.f32 1.5, %v330
    %v332 = vmul.f32 %v327, %v331
    %vm333 = vweird.f32 %v326
    %vm334 = vweird.f32 %v327
    %vm335 = vmor %vm333, %vm334
    %v336 = vsel %vm335, %v327, %v332
    %v337 = vmul.f32 %v325, %v336
    %v338 = vld [vmem:[#allocation6 + $0x4] sm:$0x1]
    %v339 = vperm.slane %v338, 0
    %v340 = vmul.f32 %v337, %v339
    %v341 = vld [vmem:[#allocation6 + $0x5] sm:$0x1]
    %v342 = vperm.slane %v341, 0
    %v343 = vadd.f32 %v340, %v342
    %v344 = vsel %vm64, %v343, 0.0
    %345 = vst [vmem:[%s3] sm:$0xff] %v344
    // Predicated region
    $region26: #{forward.1} parent=1 // pred_check
      _
    $region27: #{forward.1} parent=1 // pred_check_branch
      %347 = sbr.rel (0) target = $region29
    $region28: #{forward.1} parent=1 // pred_region
      _
    $region29: #{forward.1} parent=1 // pred_fallthru
      _
    // Predicated region
    $region30: #{forward.1} parent=1 // pred_check
      _
    $region31: #{forward.1} parent=1 // pred_check_branch
      %349 = sbr.rel (0) target = $region33
    $region32: #{forward.1} parent=1 // pred_region
      _
    $region33: #{forward.1} parent=1 // pred_fallthru
      _
    %350 = vsyncpa [#allocation3], 1
    %351 = vsyncpa [#allocation5], 1

</llo_original>
